<compile_context>
chip_gen: v5e
topology: v5e:2x2
jax: 0.10.0
libtpu: 0.0.40
codegen_flags: <defaults>
</compile_context>

<pallas_src>
import functools

import jax
import jax.numpy as jnp
from jax.experimental import pallas as pl
from jax.experimental.pallas import tpu as pltpu

HIDDEN = 128  # lane-padded hidden width used inside the kernel


def _round_up(n, m):
    return ((n + m - 1) // m) * m


def _tpu_generation():
    """Best-effort TPU generation sniff (5 / 6 / 7 / None). Safe fallback."""
    try:
        kind = jax.devices()[0].device_kind.lower()
    except Exception:
        return None
    if "v7" in kind or "7x" in kind:
        return 7
    if "v6" in kind:
        return 6
    if "v5" in kind:
        return 5
    return None


def _mlp_kernel(x_ref, w1_ref, w_ref, vec_ref, o_ref, *, matmul_dtype, act_dtype):
    """One batch tile of the fused 4-layer MLP.

    x_ref:   (tile_b, input_dim)  f32 or bf16
    w1_ref:  (input_dim, 128)     matmul_dtype
    w_ref:   (3, 128, 128)        matmul_dtype  [0]=W2 pad, [1]=W3 pad,
                                                [2]=W4 as padded column 0
    vec_ref: (8, 128)             f32  rows: 0=b1, 1=b2(pad), 2=b3(pad),
                                             3=[b4, 0, ...]
    o_ref:   (tile_b, 1)          f32
    """
    x = x_ref[...]
    if x.dtype != matmul_dtype:
        x = x.astype(matmul_dtype)

    b1 = vec_ref[0:1, :].astype(act_dtype)
    b2 = vec_ref[1:2, :].astype(act_dtype)
    b3 = vec_ref[2:3, :].astype(act_dtype)

    # Layer 1: Linear(input_dim, 128) + ReLU   (Dropout -> identity in eval).
    # MXU accumulates in f32; result rounds once to act_dtype so the bias-add,
    # ReLU and the next layer's input stay bf16 on v6e/v7x (f32 on v5e).
    h = jnp.dot(x, w1_ref[...],
                preferred_element_type=jnp.float32).astype(act_dtype)
    h = jnp.maximum(h + b1, 0.0)

    # Layer 2: Linear(128, 64) + ReLU, zero-padded to 128 lanes.
    h = jnp.dot(h.astype(matmul_dtype), w_ref[0],
                preferred_element_type=jnp.float32).astype(act_dtype)
    h = jnp.maximum(h + b2, 0.0)

    # Layer 3: Linear(64, 32) + ReLU, zero-padded to 128 lanes.
    h = jnp.dot(h.astype(matmul_dtype), w_ref[1],
                preferred_element_type=jnp.float32).astype(act_dtype)
    h = jnp.maximum(h + b3, 0.0)

    # Layer 4: Linear(32, 1) on the MXU (the MXU slot has plenty of slack);
    # W4 is column 0 of w_ref[2], the rest is zero.  f32 accumulation.
    out = jnp.dot(h.astype(matmul_dtype), w_ref[2],
                  preferred_element_type=jnp.float32)
    o_ref[...] = (out[:, 0:1] + vec_ref[3:4, 0:1]).astype(o_ref.dtype)


def _pack_params(params, matmul_dtype):
    """Pad hidden widths to 128 lanes and consolidate the 8 operands into 3."""
    w1, b1, w2, b2, w3, b3, w4, b4 = params
    H = HIDDEN
    # Zero padding is exact because padded activations are ReLU(0 + 0) = 0.
    w2p = jnp.zeros((H, H), jnp.float32).at[: w2.shape[0], : w2.shape[1]].set(w2)
    w3p = jnp.zeros((H, H), jnp.float32).at[: w3.shape[0], : w3.shape[1]].set(w3)
    w4p = jnp.zeros((H, H), jnp.float32).at[: w4.shape[0], : w4.shape[1]].set(w4)
    w1p = w1.astype(matmul_dtype)
    wstack = jnp.stack([w2p, w3p, w4p]).astype(matmul_dtype)

    vec = jnp.zeros((8, H), jnp.float32)
    vec = vec.at[0, : b1.shape[0]].set(b1)
    vec = vec.at[1, : b2.shape[0]].set(b2)
    vec = vec.at[2, : b3.shape[0]].set(b3)
    vec = vec.at[3, 0].set(b4[0])
    return w1p, wstack, vec


def bioavailability_mlp(x, params, *, tile_b=8192, matmul_dtype=jnp.bfloat16,
                        act_dtype=None):
    """Fused MLP forward. x: (B, input_dim) f32 or bf16 -> (B, 1) f32.

    tile_b: rows per grid step (default 8192; auto-clamped to a ~48 MiB VMEM
    working set, to the batch size, and to >=2 grid steps on v7x).
    matmul_dtype: MXU input dtype (bf16 default; float32 for exact matmuls).
    act_dtype: dtype of the bias-add/ReLU chain; default bf16 on v6e/v7x and
    f32 on v5e (no bf16 VALU there).
    """
    B, in_dim = x.shape
    gen = _tpu_generation()
    if act_dtype is None:
        act_dtype = jnp.float32 if gen == 5 else jnp.bfloat16

    w1p, wstack, vec = _pack_params(params, matmul_dtype)

    x_bytes = jnp.dtype(x.dtype).itemsize
    # Cap the tile so the per-step working set stays under ~48 MiB
    # (comfortably below v7x's 64 MiB physical VMEM).
    per_row_bytes = 2 * in_dim * x_bytes + 6 * HIDDEN * 4 + 2 * 4
    budget = 48 << 20
    tile_b = min(tile_b, max(256, (budget // per_row_bytes) // 8 * 8))
    tile_b = min(tile_b, _round_up(B, 8))          # keep sublane-aligned tiles
    if gen == 7 and B >= 4096:
        # 2 TensorCores per chip on v7x: guarantee >= 2 grid steps so the
        # "parallel" axis actually gives both cores work.
        tile_b = min(tile_b, max(2048, _round_up((B + 1) // 2, 8)))

    Bp = _round_up(B, tile_b)
    if Bp != B:
        x = jnp.pad(x, ((0, Bp - B), (0, 0)))      # padded rows sliced off below

    # Explicit scoped-VMEM limit: defaults (16/32 MiB) can be below what a
    # large batch tile needs.  Estimate pessimistically (f32 intermediates).
    est = (2 * tile_b * in_dim * x_bytes           # double-buffered input tile
           + 2 * tile_b * 4                        # double-buffered output tile
           + 6 * tile_b * HIDDEN * 4               # activation working set
           + (in_dim * HIDDEN + 3 * HIDDEN * HIDDEN)
           * jnp.dtype(matmul_dtype).itemsize      # resident weights
           + 8 * HIDDEN * 4)                       # bias pack
    cap = (100 << 20) if gen in (5, 6) else (56 << 20)
    vmem_limit = int(min(cap, max(32 << 20, int(1.25 * est))))

    grid = (Bp // tile_b,)
    kernel = functools.partial(_mlp_kernel, matmul_dtype=matmul_dtype,
                               act_dtype=act_dtype)

    out = pl.pallas_call(
        kernel,
        out_shape=jax.ShapeDtypeStruct((Bp, 1), jnp.float32),
        grid=grid,
        in_specs=[
            # Batch-tiled input: Pallas prefetches tile i+1 while computing i.
            pl.BlockSpec((tile_b, in_dim), lambda i: (i, 0)),
            # Weights / packed vectors: constant index maps -> VMEM-resident.
            pl.BlockSpec(w1p.shape, lambda i: (0, 0)),
            pl.BlockSpec(wstack.shape, lambda i: (0, 0, 0)),
            pl.BlockSpec(vec.shape, lambda i: (0, 0)),
        ],
        out_specs=pl.BlockSpec((tile_b, 1), lambda i: (i, 0)),
        compiler_params=pltpu.CompilerParams(
            dimension_semantics=("parallel",),     # 2 TCs on v7x; no-op otherwise
            vmem_limit_bytes=vmem_limit,
        ),
    )(x, w1p, wstack, vec)

    return out[:B]


def init_params(key, input_dim):
    """PyTorch-style init. Weights stored (in_features, out_features); biases 1-D."""
    dims = [(input_dim, 128), (128, 64), (64, 32), (32, 1)]
    params = []
    for fan_in, fan_out in dims:
        kw, kb, key = jax.random.split(key, 3)
        bound = 1.0 / jnp.sqrt(jnp.float32(fan_in))
        w = jax.random.uniform(kw, (fan_in, fan_out), jnp.float32, -bound, bound)
        b = jax.random.uniform(kb, (fan_out,), jnp.float32, -bound, bound)
        params += [w, b]
    return tuple(params)


def reference_mlp(x, params, matmul_dtype=jnp.float32, act_dtype=jnp.float32):
    """Pure-JAX reference mirroring the kernel's precision choices.
    Defaults give the plain f32 PyTorch-equivalent forward."""
    w1, b1, w2, b2, w3, b3, w4, b4 = params

    def layer(h, w, b):
        y = jnp.dot(h.astype(matmul_dtype), w.astype(matmul_dtype),
                    preferred_element_type=jnp.float32).astype(act_dtype)
        return jnp.maximum(y + b.astype(act_dtype), 0.0)

    h = layer(x, w1, b1)
    h = layer(h, w2, b2)
    h = layer(h, w3, b3)
    return jnp.dot(h.astype(matmul_dtype), w4.astype(matmul_dtype),
                   preferred_element_type=jnp.float32) + b4


if __name__ == "__main__":
    key = jax.random.PRNGKey(0)
    k_x, k_x2, k_p = jax.random.split(key, 3)

    input_dim = 32  # e.g. 32 molecular descriptor features
    params = init_params(k_p, input_dim)

    gen = _tpu_generation()
    act_dtype = jnp.float32 if gen == 5 else jnp.bfloat16

    # --- Small single-tile check ------------------------------------------
    batch = 8
    x = jax.random.normal(k_x, (batch, input_dim), jnp.float32)
    out = jax.block_until_ready(bioavailability_mlp(x, params))
    assert out.shape == (batch, 1), out.shape

    ref_match = reference_mlp(x, params, matmul_dtype=jnp.bfloat16,
                              act_dtype=act_dtype)
    ref_f32 = reference_mlp(x, params)
    assert jnp.allclose(out, ref_match, atol=5e-3, rtol=5e-3), (
        f"max abs err vs matching-precision ref = "
        f"{jnp.max(jnp.abs(out - ref_match))}")
    assert jnp.allclose(out, ref_f32, atol=1e-1, rtol=1e-1), (
        f"max abs err vs f32 ref = {jnp.max(jnp.abs(out - ref_f32))}")

    # --- Multi-tile + ragged-batch check (exercises the grid & padding) ----
    batch2 = 300
    x2 = jax.random.normal(k_x2, (batch2, input_dim), jnp.float32)
    out2 = jax.block_until_ready(bioavailability_mlp(x2, params, tile_b=128))
    assert out2.shape == (batch2, 1), out2.shape
    ref2 = reference_mlp(x2, params, matmul_dtype=jnp.bfloat16,
                         act_dtype=act_dtype)
    assert jnp.allclose(out2, ref2, atol=5e-3, rtol=5e-3), (
        f"max abs err (multi-tile) = {jnp.max(jnp.abs(out2 - ref2))}")

    print("KERNEL_OK")
</pallas_src>

<mosaic_0001>
module attributes {stable_mosaic.version = 11 : i64} {
  func.func @_mlp_kernel(%arg0: i32, %arg1: memref<8x32xf32, #tpu.memory_space<vmem>>, %arg2: memref<32x128xbf16, #tpu.memory_space<vmem>>, %arg3: memref<3x128x128xbf16, #tpu.memory_space<vmem>>, %arg4: memref<8x128xf32, #tpu.memory_space<vmem>>, %arg5: memref<8x1xf32, #tpu.memory_space<vmem>>) attributes {dimension_semantics = [#tpu.dimension_semantics<parallel>], iteration_bounds = array<i64: 1>, scalar_prefetch = 0 : i64, scratch_operands = 0 : i64, tpu.core_type = #tpu.core_type<tc>, window_params = [{transform_indices = @transform_0, window_bounds = array<i64: 8, 32>}, {pipeline_mode = #tpu.pipeline_mode<synchronous>, transform_indices = @transform_1, window_bounds = array<i64: 32, 128>}, {pipeline_mode = #tpu.pipeline_mode<synchronous>, transform_indices = @transform_2, window_bounds = array<i64: 3, 128, 128>}, {pipeline_mode = #tpu.pipeline_mode<synchronous>, transform_indices = @transform_3, window_bounds = array<i64: 8, 128>}, {transform_indices = @transform_4, window_bounds = array<i64: 8, 1>}]} {
    %c0 = arith.constant 0 : index
    %c0_0 = arith.constant 0 : index
    %0 = vector.load %arg1[%c0, %c0_0] : memref<8x32xf32, #tpu.memory_space<vmem>>, vector<8x32xf32>
    %1 = arith.truncf %0 : vector<8x32xf32> to vector<8x32xbf16>
    %c0_1 = arith.constant 0 : index
    %c0_2 = arith.constant 0 : index
    %2 = vector.load %arg4[%c0_1, %c0_2] : memref<8x128xf32, #tpu.memory_space<vmem>>, vector<1x128xf32>
    %3 = arith.truncf %2 : vector<1x128xf32> to vector<1x128xbf16>
    %c1 = arith.constant 1 : index
    %c0_3 = arith.constant 0 : index
    %4 = vector.load %arg4[%c1, %c0_3] : memref<8x128xf32, #tpu.memory_space<vmem>>, vector<1x128xf32>
    %5 = arith.truncf %4 : vector<1x128xf32> to vector<1x128xbf16>
    %c2 = arith.constant 2 : index
    %c0_4 = arith.constant 0 : index
    %6 = vector.load %arg4[%c2, %c0_4] : memref<8x128xf32, #tpu.memory_space<vmem>>, vector<1x128xf32>
    %7 = arith.truncf %6 : vector<1x128xf32> to vector<1x128xbf16>
    %c0_5 = arith.constant 0 : index
    %c0_6 = arith.constant 0 : index
    %8 = vector.load %arg2[%c0_5, %c0_6] : memref<32x128xbf16, #tpu.memory_space<vmem>>, vector<32x128xbf16>
    %cst = arith.constant dense<0.000000e+00> : vector<8x128xf32>
    %9 = tpu.matmul %1, %8, %cst {dimension_numbers = #tpu.dot_dimension_numbers<[1], [0], [0], [1], [0, 0, 1, 1], [], []>} : vector<8x32xbf16>, vector<32x128xbf16>, vector<8x128xf32> -> vector<8x128xf32>
    %10 = arith.truncf %9 : vector<8x128xf32> to vector<8x128xbf16>
    %11 = vector.broadcast %3 : vector<1x128xbf16> to vector<8x128xbf16>
    %12 = arith.addf %10, %11 : vector<8x128xbf16>
    %cst_7 = arith.constant 0.000000e+00 : bf16
    %13 = vector.broadcast %cst_7 : bf16 to vector<8x128xbf16>
    %14 = arith.maximumf %12, %13 : vector<8x128xbf16>
    %c0_8 = arith.constant 0 : index
    %c0_9 = arith.constant 0 : index
    %c0_10 = arith.constant 0 : index
    %15 = vector.load %arg3[%c0_8, %c0_9, %c0_10] : memref<3x128x128xbf16, #tpu.memory_space<vmem>>, vector<1x128x128xbf16>
    %16 = vector.shape_cast %15 : vector<1x128x128xbf16> to vector<128x128xbf16>
    %cst_11 = arith.constant dense<0.000000e+00> : vector<8x128xf32>
    %17 = tpu.matmul %14, %16, %cst_11 {dimension_numbers = #tpu.dot_dimension_numbers<[1], [0], [0], [1], [0, 0, 1, 1], [], []>} : vector<8x128xbf16>, vector<128x128xbf16>, vector<8x128xf32> -> vector<8x128xf32>
    %18 = arith.truncf %17 : vector<8x128xf32> to vector<8x128xbf16>
    %19 = vector.broadcast %5 : vector<1x128xbf16> to vector<8x128xbf16>
    %20 = arith.addf %18, %19 : vector<8x128xbf16>
    %cst_12 = arith.constant 0.000000e+00 : bf16
    %21 = vector.broadcast %cst_12 : bf16 to vector<8x128xbf16>
    %22 = arith.maximumf %20, %21 : vector<8x128xbf16>
    %c1_13 = arith.constant 1 : index
    %c0_14 = arith.constant 0 : index
    %c0_15 = arith.constant 0 : index
    %23 = vector.load %arg3[%c1_13, %c0_14, %c0_15] : memref<3x128x128xbf16, #tpu.memory_space<vmem>>, vector<1x128x128xbf16>
    %24 = vector.shape_cast %23 : vector<1x128x128xbf16> to vector<128x128xbf16>
    %cst_16 = arith.constant dense<0.000000e+00> : vector<8x128xf32>
    %25 = tpu.matmul %22, %24, %cst_16 {dimension_numbers = #tpu.dot_dimension_numbers<[1], [0], [0], [1], [0, 0, 1, 1], [], []>} : vector<8x128xbf16>, vector<128x128xbf16>, vector<8x128xf32> -> vector<8x128xf32>
    %26 = arith.truncf %25 : vector<8x128xf32> to vector<8x128xbf16>
    %27 = vector.broadcast %7 : vector<1x128xbf16> to vector<8x128xbf16>
    %28 = arith.addf %26, %27 : vector<8x128xbf16>
    %cst_17 = arith.constant 0.000000e+00 : bf16
    %29 = vector.broadcast %cst_17 : bf16 to vector<8x128xbf16>
    %30 = arith.maximumf %28, %29 : vector<8x128xbf16>
    %c2_18 = arith.constant 2 : index
    %c0_19 = arith.constant 0 : index
    %c0_20 = arith.constant 0 : index
    %31 = vector.load %arg3[%c2_18, %c0_19, %c0_20] : memref<3x128x128xbf16, #tpu.memory_space<vmem>>, vector<1x128x128xbf16>
    %32 = vector.shape_cast %31 : vector<1x128x128xbf16> to vector<128x128xbf16>
    %cst_21 = arith.constant dense<0.000000e+00> : vector<8x128xf32>
    %33 = tpu.matmul %30, %32, %cst_21 {dimension_numbers = #tpu.dot_dimension_numbers<[1], [0], [0], [1], [0, 0, 1, 1], [], []>} : vector<8x128xbf16>, vector<128x128xbf16>, vector<8x128xf32> -> vector<8x128xf32>
    %34 = vector.extract_strided_slice %33 {offsets = [0, 0], sizes = [8, 1], strides = [1, 1]} : vector<8x128xf32> to vector<8x1xf32>
    %c3 = arith.constant 3 : index
    %c0_22 = arith.constant 0 : index
    %35 = vector.load %arg4[%c3, %c0_22] : memref<8x128xf32, #tpu.memory_space<vmem>>, vector<1x1xf32>
    %36 = vector.broadcast %35 : vector<1x1xf32> to vector<8x1xf32>
    %37 = arith.addf %34, %36 : vector<8x1xf32>
    %c0_23 = arith.constant 0 : index
    %c0_24 = arith.constant 0 : index
    %38 = vector.load %arg5[%c0_23, %c0_24] : memref<8x1xf32, #tpu.memory_space<vmem>>, vector<8x1xf32>
    tpu.vector_store %arg5[%c0_23, %c0_24], %37 {strides = array<i32>} : memref<8x1xf32, #tpu.memory_space<vmem>>, vector<8x1xf32>,
    return
  }
  func.func @transform_0(%arg0: i32) -> (i32, i32) {
    %c0_i32 = arith.constant 0 : i32
    %c0_i32_0 = arith.constant 0 : i32
    return %arg0, %c0_i32 : i32, i32
  }
  func.func @transform_1(%arg0: i32) -> (i32, i32) {
    %c0_i32 = arith.constant 0 : i32
    %c0_i32_0 = arith.constant 0 : i32
    %c0_i32_1 = arith.constant 0 : i32
    return %c0_i32, %c0_i32_0 : i32, i32
  }
  func.func @transform_2(%arg0: i32) -> (i32, i32, i32) {
    %c0_i32 = arith.constant 0 : i32
    %c0_i32_0 = arith.constant 0 : i32
    %c0_i32_1 = arith.constant 0 : i32
    %c0_i32_2 = arith.constant 0 : i32
    return %c0_i32, %c0_i32_0, %c0_i32_1 : i32, i32, i32
  }
  func.func @transform_3(%arg0: i32) -> (i32, i32) {
    %c0_i32 = arith.constant 0 : i32
    %c0_i32_0 = arith.constant 0 : i32
    %c0_i32_1 = arith.constant 0 : i32
    return %c0_i32, %c0_i32_0 : i32, i32
  }
  func.func @transform_4(%arg0: i32) -> (i32, i32) {
    %c0_i32 = arith.constant 0 : i32
    %c0_i32_0 = arith.constant 0 : i32
    return %arg0, %c0_i32 : i32, i32
  }
}

</mosaic_0001>

<llo_original>
// kernel: tpu_custom_call.1
$region0: #{tpu_custom_call.1}
  #allocation0 [shape = 'u32[]', space=smem, size = 0x4, offset = 0x4, fixed_abs, tag = 'smem constant byte address 0x4 - core index']
  #allocation1 [shape = 'u32[72,128]{1,0:T(1,128)}', space=vmem, size = 0x9000, scoped, tag = 'internal scratch']
  %s0 = inlined_call_operand.hbm [shape: f32[8,32], index: 0, kind: input, shape index: {}]
  %s1 = inlined_call_operand.hbm [shape: bf16[32,128], index: 1, kind: input, shape index: {}]
  %s2 = inlined_call_operand.hbm [shape: bf16[3,128,128], index: 2, kind: input, shape index: {}]
  %s3 = inlined_call_operand.hbm [shape: f32[8,128], index: 3, kind: input, shape index: {}]
  %s4 = inlined_call_operand.vmem [shape: f32[8,1], index: 4, kind: output, shape index: {}]
  %s5 = sld [smem:[#allocation0]]
  $region42: #{tpu_custom_call.1} parent=0
    _
  %s7 = ssub.s32 1, %s5
  %s8 = scalar_select 0, %s7, %s5
  $region1: #{tpu_custom_call.1} parent=0
    #allocation2 [shape = 'u8[4096]{0}', space=vmem, size = 0x1000, scoped, tag = 'input window, operand 0, single buffered']
    #allocation3 [shape = 's32[1]{0}', space=sflag, size = 0x4, scoped, tag = 'scoped memory for tpu_custom_call.1']
    #allocation4 [shape = 'u8[8192]{0}', space=vmem, size = 0x2000, scoped, tag = 'input window, operand 1, single buffered']
    #allocation5 [shape = 's32[1]{0}', space=sflag, size = 0x4, scoped, tag = 'scoped memory for tpu_custom_call.1']
    #allocation6 [shape = 'u8[98304]{0}', space=vmem, size = 0x18000, scoped, tag = 'input window, operand 2, single buffered']
    #allocation7 [shape = 'u8[4096]{0}', space=vmem, size = 0x1000, scoped, tag = 'input window, operand 3, single buffered']
    #allocation8 [shape = 's32[1]{0}', space=sflag, size = 0x4, scoped, tag = 'scoped memory for tpu_custom_call.1']
    %9 = vsyncpa [#allocation3], 0
    %10 = vsyncpa [#allocation5], 0
    %11 = vsyncpa [#allocation8], 0
    // Predicated region
    $region2: #{tpu_custom_call.1} parent=1 // pred_check
      _
    $region3: #{tpu_custom_call.1} parent=1 // pred_check_branch
      %13 = sbr.rel (0) target = $region5
    $region4: #{tpu_custom_call.1} parent=1 // pred_region
      %15 = vsyncadd [#allocation3], 0
      %s17 = sshll.u32 %s0, 4
      %s18 = int_to_ptr.hbm [resolvable:$true] %s17
      %s19 = sshll.u32 [#allocation2], 4
      %s20 = int_to_ptr.vmem [resolvable:$true] %s19
      %22 = dma.hbm_to_vmem [thread:$0]  %s18, 128, %s20, [#allocation3]
    $region5: #{tpu_custom_call.1} parent=1 // pred_fallthru
      _
    // Predicated region
    $region6: #{tpu_custom_call.1} parent=1 // pred_check
      _
    $region7: #{tpu_custom_call.1} parent=1 // pred_check_branch
      %24 = sbr.rel (0) target = $region9
    $region8: #{tpu_custom_call.1} parent=1 // pred_region
      %26 = vsyncadd [#allocation5], 0
      %s27 = sshll.u32 %s1, 4
      %s28 = int_to_ptr.hbm [resolvable:$true] %s27
      %s29 = sshll.u32 [#allocation4], 4
      %s30 = int_to_ptr.vmem [resolvable:$true] %s29
      %35 = dma.hbm_to_vmem [thread:$0]  %s28, 256, %s30, [#allocation5], 64, 64, 4
    $region9: #{tpu_custom_call.1} parent=1 // pred_fallthru
      _
    // Predicated region
    $region10: #{tpu_custom_call.1} parent=1 // pred_check
      _
    $region11: #{tpu_custom_call.1} parent=1 // pred_check_branch
      %37 = sbr.rel (0) target = $region13
    $region12: #{tpu_custom_call.1} parent=1 // pred_region
      %39 = vsyncadd [#allocation5], 0
      %s40 = sshll.u32 %s2, 4
      %s41 = int_to_ptr.hbm [resolvable:$true] %s40
      %s42 = sshll.u32 [#allocation6], 4
      %s43 = int_to_ptr.vmem [resolvable:$true] %s42
      %48 = dma.hbm_to_vmem [thread:$0]  %s41, 3072, %s43, [#allocation5], 64, 64, 4
    $region13: #{tpu_custom_call.1} parent=1 // pred_fallthru
      _
    // Predicated region
    $region14: #{tpu_custom_call.1} parent=1 // pred_check
      _
    $region15: #{tpu_custom_call.1} parent=1 // pred_check_branch
      %50 = sbr.rel (0) target = $region17
    $region16: #{tpu_custom_call.1} parent=1 // pred_region
      %52 = vsyncadd [#allocation8], 0
      %s54 = sshll.u32 %s3, 4
      %s55 = int_to_ptr.hbm [resolvable:$true] %s54
      %s56 = sshll.u32 [#allocation7], 4
      %s57 = int_to_ptr.vmem [resolvable:$true] %s56
      %59 = dma.hbm_to_vmem [thread:$0]  %s55, 128, %s57, [#allocation8]
    $region17: #{tpu_custom_call.1} parent=1 // pred_fallthru
      _
    // Predicated region
    $region18: #{tpu_custom_call.1} parent=1 // pred_check
      _
    $region19: #{tpu_custom_call.1} parent=1 // pred_check_branch
      %61 = sbr.rel (0) target = $region21
    $region20: #{tpu_custom_call.1} parent=1 // pred_region
      %63 = dma.done [#allocation3], 128
    $region21: #{tpu_custom_call.1} parent=1 // pred_fallthru
      _
    // Predicated region
    $region22: #{tpu_custom_call.1} parent=1 // pred_check
      _
    $region23: #{tpu_custom_call.1} parent=1 // pred_check_branch
      %65 = sbr.rel (0) target = $region25
    $region24: #{tpu_custom_call.1} parent=1 // pred_region
      %67 = dma.done [#allocation5], 256
    $region25: #{tpu_custom_call.1} parent=1 // pred_fallthru
      _
    // Predicated region
    $region26: #{tpu_custom_call.1} parent=1 // pred_check
      _
    $region27: #{tpu_custom_call.1} parent=1 // pred_check_branch
      %69 = sbr.rel (0) target = $region29
    $region28: #{tpu_custom_call.1} parent=1 // pred_region
      %71 = dma.done [#allocation5], 3072
    $region29: #{tpu_custom_call.1} parent=1 // pred_fallthru
      _
    // Predicated region
    $region30: #{tpu_custom_call.1} parent=1 // pred_check
      _
    $region31: #{tpu_custom_call.1} parent=1 // pred_check_branch
      %73 = sbr.rel (0) target = $region33
    $region32: #{tpu_custom_call.1} parent=1 // pred_region
      %75 = dma.done [#allocation8], 128
    $region33: #{tpu_custom_call.1} parent=1 // pred_fallthru
      _
    %v77 = vld [vmem:[#allocation2] sm:$0xff]
    %v78 = vpack.c.bf16 %v77, %v77
    %v79 = vld [vmem:[#allocation7] sm:$0x1]
    %v80 = vpack.c.bf16 %v79, %v79
    %v81 = vld [vmem:[#allocation7 + $0x1] sm:$0x1]
    %v82 = vpack.c.bf16 %v81, %v81
    %v83 = vld [vmem:[#allocation7 + $0x2] sm:$0x1]
    %v84 = vpack.c.bf16 %v83, %v83
    %v85 = vld [vmem:[#allocation4] sm:$0xf]
    %v86 = vld [vmem:[#allocation4 + $0x4] sm:$0xf]
    %v87 = vld [vmem:[#allocation4 + $0x8] sm:$0xf]
    %v88 = vld [vmem:[#allocation4 + $0xc] sm:$0xf]
    %v93 = vunpack.c.l.b16 %v85
    %v94 = vunpack.c.l.b16 %v86
    %v95 = vunpack.c.l.b16 %v87
    %v96 = vunpack.c.l.b16 %v88
    %v97 = vpack.c.b16 %v94, %v93
    %v98 = vpack.c.b16 %v96, %v95
    %vm101 = vcmask 261120
    %v103 = vsel %vm101, %v78, 0
    %105 = vmatpush.bf16.msra.mxu0 0
    %106 = vmatpush.bf16.msra.mxu0 0
    %107 = vmatpush.bf16.msra.mxu0 0
    %108 = vmatpush.bf16.msra.mxu0 0
    %109 = vmatpush.bf16.msra.mxu0 0
    %110 = vmatpush.bf16.msra.mxu0 0
    %111 = vmatpush.bf16.msra.mxu0 %v98
    %112 = vmatpush.bf16.msra.mxu0 %v97
    %113 = vmatmul.bf16.gmra.mxu0 %v103
    %v114 = vpop.f32.mrf.mxu0
    %v115 = vadd.f32 0.0, %v114
    %v116 = vpop.f32.mrf.mxu0
    %117 = vdwg.mxu0
    %v118 = vpack.c.bf16 %v115, %v115
    %v120 = vpack.i.b16 %v80, %v80
    %v122 = vperm.slane %v120, 0
    %v123 = vunpack.c.l.bf16 %v118
    %v124 = vunpack.c.l.bf16 %v122
    %v125 = vadd.f32 %v123, %v124
    %v126 = vpack.c.bf16 %v125, %v125
    %v127 = vunpack.c.l.bf16 %v126
    %v128 = vmax.f32 %v127, 0.0
    %v129 = vpack.c.bf16 %v128, %v128
    %v130 = vld [vmem:[#allocation6] sm:$0xf]
    %v131 = vld [vmem:[#allocation6 + $0x4] sm:$0xf]
    %v132 = vld [vmem:[#allocation6 + $0x8] sm:$0xf]
    %v133 = vld [vmem:[#allocation6 + $0xc] sm:$0xf]
    %v134 = vld [vmem:[#allocation6 + $0x10] sm:$0xf]
    %v135 = vld [vmem:[#allocation6 + $0x14] sm:$0xf]
    %v136 = vld [vmem:[#allocation6 + $0x18] sm:$0xf]
    %v137 = vld [vmem:[#allocation6 + $0x1c] sm:$0xf]
    %v138 = vld [vmem:[#allocation6 + $0x20] sm:$0xf]
    %v139 = vld [vmem:[#allocation6 + $0x24] sm:$0xf]
    %v140 = vld [vmem:[#allocation6 + $0x28] sm:$0xf]
    %v141 = vld [vmem:[#allocation6 + $0x2c] sm:$0xf]
    %v142 = vld [vmem:[#allocation6 + $0x30] sm:$0xf]
    %v143 = vld [vmem:[#allocation6 + $0x34] sm:$0xf]
    %v144 = vld [vmem:[#allocation6 + $0x38] sm:$0xf]
    %v145 = vld [vmem:[#allocation6 + $0x3c] sm:$0xf]
    %v162 = vunpack.c.l.b16 %v130
    %v163 = vunpack.c.l.b16 %v131
    %v164 = vunpack.c.l.b16 %v132
    %v165 = vunpack.c.l.b16 %v133
    %v166 = vunpack.c.l.b16 %v134
    %v167 = vunpack.c.l.b16 %v135
    %v168 = vunpack.c.l.b16 %v136
    %v169 = vunpack.c.l.b16 %v137
    %v170 = vunpack.c.l.b16 %v138
    %v171 = vunpack.c.l.b16 %v139
    %v172 = vunpack.c.l.b16 %v140
    %v173 = vunpack.c.l.b16 %v141
    %v174 = vunpack.c.l.b16 %v142
    %v175 = vunpack.c.l.b16 %v143
    %v176 = vunpack.c.l.b16 %v144
    %v177 = vunpack.c.l.b16 %v145
    %v178 = vpack.c.b16 %v163, %v162
    %v179 = vpack.c.b16 %v165, %v164
    %v180 = vpack.c.b16 %v167, %v166
    %v181 = vpack.c.b16 %v169, %v168
    %v182 = vpack.c.b16 %v171, %v170
    %v183 = vpack.c.b16 %v173, %v172
    %v184 = vpack.c.b16 %v175, %v174
    %v185 = vpack.c.b16 %v177, %v176
    %194 = vmatpush.bf16.msra.mxu0 %v185
    %195 = vmatpush.bf16.msra.mxu0 %v184
    %196 = vmatpush.bf16.msra.mxu0 %v183
    %197 = vmatpush.bf16.msra.mxu0 %v182
    %198 = vmatpush.bf16.msra.mxu0 %v181
    %199 = vmatpush.bf16.msra.mxu0 %v180
    %200 = vmatpush.bf16.msra.mxu0 %v179
    %201 = vmatpush.bf16.msra.mxu0 %v178
    %202 = vmatmul.bf16.gmra.mxu0 %v129
    %v203 = vpop.f32.mrf.mxu0
    %v204 = vadd.f32 0.0, %v203
    %v205 = vpop.f32.mrf.mxu0
    %206 = vdwg.mxu0
    %v207 = vpack.c.bf16 %v204, %v204
    %v209 = vpack.i.b16 %v82, %v82
    %v211 = vperm.slane %v209, 0
    %v212 = vunpack.c.l.bf16 %v207
    %v213 = vunpack.c.l.bf16 %v211
    %v214 = vadd.f32 %v212, %v213
    %v215 = vpack.c.bf16 %v214, %v214
    %v216 = vunpack.c.l.bf16 %v215
    %v217 = vmax.f32 %v216, 0.0
    %v218 = vpack.c.bf16 %v217, %v217
    %s219 = scalar_lea.vmem [#allocation6], 64
    %v220 = vld [vmem:[%s219] sm:$0xf]
    %v221 = vld [vmem:[%s219 + $0x4] sm:$0xf]
    %v222 = vld [vmem:[%s219 + $0x8] sm:$0xf]
    %v223 = vld [vmem:[%s219 + $0xc] sm:$0xf]
    %v224 = vld [vmem:[%s219 + $0x10] sm:$0xf]
    %v225 = vld [vmem:[%s219 + $0x14] sm:$0xf]
    %v226 = vld [vmem:[%s219 + $0x18] sm:$0xf]
    %v227 = vld [vmem:[%s219 + $0x1c] sm:$0xf]
    %v228 = vld [vmem:[%s219 + $0x20] sm:$0xf]
    %v229 = vld [vmem:[%s219 + $0x24] sm:$0xf]
    %v230 = vld [vmem:[%s219 + $0x28] sm:$0xf]
    %v231 = vld [vmem:[%s219 + $0x2c] sm:$0xf]
    %v232 = vld [vmem:[%s219 + $0x30] sm:$0xf]
    %v233 = vld [vmem:[%s219 + $0x34] sm:$0xf]
    %v234 = vld [vmem:[%s219 + $0x38] sm:$0xf]
    %v235 = vld [vmem:[%s219 + $0x3c] sm:$0xf]
    %v252 = vunpack.c.l.b16 %v220
    %v253 = vunpack.c.l.b16 %v221
    %v254 = vunpack.c.l.b16 %v222
    %v255 = vunpack.c.l.b16 %v223
    %v256 = vunpack.c.l.b16 %v224
    %v257 = vunpack.c.l.b16 %v225
    %v258 = vunpack.c.l.b16 %v226
    %v259 = vunpack.c.l.b16 %v227
    %v260 = vunpack.c.l.b16 %v228
    %v261 = vunpack.c.l.b16 %v229
    %v262 = vunpack.c.l.b16 %v230
    %v263 = vunpack.c.l.b16 %v231
    %v264 = vunpack.c.l.b16 %v232
    %v265 = vunpack.c.l.b16 %v233
    %v266 = vunpack.c.l.b16 %v234
    %v267 = vunpack.c.l.b16 %v235
    %v268 = vpack.c.b16 %v253, %v252
    %v269 = vpack.c.b16 %v255, %v254
    %v270 = vpack.c.b16 %v257, %v256
    %v271 = vpack.c.b16 %v259, %v258
    %v272 = vpack.c.b16 %v261, %v260
    %v273 = vpack.c.b16 %v263, %v262
    %v274 = vpack.c.b16 %v265, %v264
    %v275 = vpack.c.b16 %v267, %v266
    %284 = vmatpush.bf16.msra.mxu0 %v275
    %285 = vmatpush.bf16.msra.mxu0 %v274
    %286 = vmatpush.bf16.msra.mxu0 %v273
    %287 = vmatpush.bf16.msra.mxu0 %v272
    %288 = vmatpush.bf16.msra.mxu0 %v271
    %289 = vmatpush.bf16.msra.mxu0 %v270
    %290 = vmatpush.bf16.msra.mxu0 %v269
    %291 = vmatpush.bf16.msra.mxu0 %v268
    %292 = vmatmul.bf16.gmra.mxu0 %v218
    %v293 = vpop.f32.mrf.mxu0
    %v294 = vadd.f32 0.0, %v293
    %v295 = vpop.f32.mrf.mxu0
    %296 = vdwg.mxu0
    %v297 = vpack.c.bf16 %v294, %v294
    %v299 = vpack.i.b16 %v84, %v84
    %v301 = vperm.slane %v299, 0
    %v302 = vunpack.c.l.bf16 %v297
    %v303 = vunpack.c.l.bf16 %v301
    %v304 = vadd.f32 %v302, %v303
    %v305 = vpack.c.bf16 %v304, %v304
    %v306 = vunpack.c.l.bf16 %v305
    %v307 = vmax.f32 %v306, 0.0
    %v308 = vpack.c.bf16 %v307, %v307
    %s309 = scalar_lea.vmem [#allocation6], 128
    %v310 = vld [vmem:[%s309] sm:$0xf]
    %v311 = vld [vmem:[%s309 + $0x4] sm:$0xf]
    %v312 = vld [vmem:[%s309 + $0x8] sm:$0xf]
    %v313 = vld [vmem:[%s309 + $0xc] sm:$0xf]
    %v314 = vld [vmem:[%s309 + $0x10] sm:$0xf]
    %v315 = vld [vmem:[%s309 + $0x14] sm:$0xf]
    %v316 = vld [vmem:[%s309 + $0x18] sm:$0xf]
    %v317 = vld [vmem:[%s309 + $0x1c] sm:$0xf]
    %v318 = vld [vmem:[%s309 + $0x20] sm:$0xf]
    %v319 = vld [vmem:[%s309 + $0x24] sm:$0xf]
    %v320 = vld [vmem:[%s309 + $0x28] sm:$0xf]
    %v321 = vld [vmem:[%s309 + $0x2c] sm:$0xf]
    %v322 = vld [vmem:[%s309 + $0x30] sm:$0xf]
    %v323 = vld [vmem:[%s309 + $0x34] sm:$0xf]
    %v324 = vld [vmem:[%s309 + $0x38] sm:$0xf]
    %v325 = vld [vmem:[%s309 + $0x3c] sm:$0xf]
    %v342 = vunpack.c.l.b16 %v310
    %v343 = vunpack.c.l.b16 %v311
    %v344 = vunpack.c.l.b16 %v312
    %v345 = vunpack.c.l.b16 %v313
    %v346 = vunpack.c.l.b16 %v314
    %v347 = vunpack.c.l.b16 %v315
    %v348 = vunpack.c.l.b16 %v316
    %v349 = vunpack.c.l.b16 %v317
    %v350 = vunpack.c.l.b16 %v318
    %v351 = vunpack.c.l.b16 %v319
    %v352 = vunpack.c.l.b16 %v320
    %v353 = vunpack.c.l.b16 %v321
    %v354 = vunpack.c.l.b16 %v322
    %v355 = vunpack.c.l.b16 %v323
    %v356 = vunpack.c.l.b16 %v324
    %v357 = vunpack.c.l.b16 %v325
    %v358 = vpack.c.b16 %v343, %v342
    %v359 = vpack.c.b16 %v345, %v344
    %v360 = vpack.c.b16 %v347, %v346
    %v361 = vpack.c.b16 %v349, %v348
    %v362 = vpack.c.b16 %v351, %v350
    %v363 = vpack.c.b16 %v353, %v352
    %v364 = vpack.c.b16 %v355, %v354
    %v365 = vpack.c.b16 %v357, %v356
    %374 = vmatpush.bf16.msra.mxu0 %v365
    %375 = vmatpush.bf16.msra.mxu0 %v364
    %376 = vmatpush.bf16.msra.mxu0 %v363
    %377 = vmatpush.bf16.msra.mxu0 %v362
    %378 = vmatpush.bf16.msra.mxu0 %v361
    %379 = vmatpush.bf16.msra.mxu0 %v360
    %380 = vmatpush.bf16.msra.mxu0 %v359
    %381 = vmatpush.bf16.msra.mxu0 %v358
    %382 = vmatmul.bf16.gmra.mxu0 %v308
    %v383 = vpop.f32.mrf.mxu0
    %v384 = vadd.f32 0.0, %v383
    %v385 = vpop.f32.mrf.mxu0
    %386 = vdwg.mxu0
    %v387 = vld [vmem:[#allocation7 + $0x3] sm:$0x1]
    %v388 = vperm.slane %v387, 0
    %v389 = vadd.f32 %v384, %v388
    %vm390 = vcmask 7168
    %391 = vst.msk [vmem:[%s4] sm:$0xff] %vm390, %v389
    // Predicated region
    $region34: #{tpu_custom_call.1} parent=1 // pred_check
      _
    $region35: #{tpu_custom_call.1} parent=1 // pred_check_branch
      %393 = sbr.rel (0) target = $region37
    $region36: #{tpu_custom_call.1} parent=1 // pred_region
      _
    $region37: #{tpu_custom_call.1} parent=1 // pred_fallthru
      _
    // Predicated region
    $region38: #{tpu_custom_call.1} parent=1 // pred_check
      _
    $region39: #{tpu_custom_call.1} parent=1 // pred_check_branch
      %395 = sbr.rel (0) target = $region41
    $region40: #{tpu_custom_call.1} parent=1 // pred_region
      _
    $region41: #{tpu_custom_call.1} parent=1 // pred_fallthru
      _
    %396 = vsyncpa [#allocation3], 1
    %397 = vsyncpa [#allocation5], 1
    %398 = vsyncpa [#allocation8], 1

</llo_original>
